<compile_context>
chip_gen: v6e
topology: v6e:2x2x1
jax: 0.10.0
libtpu: 0.0.40
codegen_flags: <defaults>
</compile_context>

<pallas_src>
import functools
import math

import jax
import jax.numpy as jnp
from jax.experimental import pallas as pl
from jax.experimental.pallas import tpu as pltpu

LANE = 128
SUBLANE = 8

# Largest single-step batch tile (rows).  Activation temporaries are
# (tile, hidden_pad) f32; 4096 rows x 128 lanes x 4 B = 2 MiB per temporary,
# comfortably inside every generation's VMEM even with double-buffered I/O.
_SINGLE_STEP_MAX_ROWS = 4096


def _round_up(x, m):
    return (x + m - 1) // m * m


def _cdiv(a, b):
    return -(-a // b)


# --------------------------------------------------------------------------- #
# Kernel
# --------------------------------------------------------------------------- #
def _qnet_kernel(n_layers, obs_ref, act_ref, *refs):
    """refs = (w0_obs, w0_act, b0, w1, b1, ..., w_{L-1}, b_{L-1}, out_ref)."""
    out_ref = refs[-1]
    params = refs[:-1]

    # First layer: split matmul replaces concat(obs, action) @ W0.
    h = (
        jnp.dot(obs_ref[...], params[0][...], preferred_element_type=jnp.float32)
        + jnp.dot(act_ref[...], params[1][...], preferred_element_type=jnp.float32)
        + params[2][...]
    )
    if n_layers > 1:  # ReLU on hidden layers only
        h = jnp.maximum(h, 0.0)

    idx = 3
    for layer in range(1, n_layers):
        w = params[idx][...]
        b = params[idx + 1][...]
        idx += 2
        h = jnp.dot(h, w, preferred_element_type=jnp.float32) + b
        if layer < n_layers - 1:
            h = jnp.maximum(h, 0.0)

    # Narrow store: only the true Q column.  The 128-wide padding of the last
    # layer stays in VMEM; HBM only sees (batch_tile, 1).
    out_ref[...] = h[:, :1].astype(out_ref.dtype)


# --------------------------------------------------------------------------- #
# One-time parameter preparation (hoisted out of the per-call path)
# --------------------------------------------------------------------------- #
def prepare_qnet_params(weights, biases, n_obs):
    """Split layer-0 weight into [obs; action] halves and zero-pad every
    hidden/output feature dim up to a multiple of 128 so all matmul RHS and
    activations are lane-dense.  Zero padding is exact (padded activations are
    0 after the zero bias, padded weight rows/cols are 0).

    Call ONCE at init / after each parameter update, not per forward.

    weights[i]: (in_i, out_i) float32   (x @ W convention, i.e. torch W^T)
    biases[i]:  (out_i,) or (1, out_i)  float32
    Returns a tuple of padded arrays consumable by qnet_forward().
    """
    n_layers = len(weights)
    out_pads = [_round_up(w.shape[1], LANE) for w in weights]

    def pad_w(w, out_pad, in_pad=None):
        in_dim, out_dim = w.shape
        in_t = in_dim if in_pad is None else in_pad
        return jnp.pad(
            w.astype(jnp.float32), ((0, in_t - in_dim), (0, out_pad - out_dim))
        )

    def pad_b(b, out_pad):
        b = jnp.asarray(b, jnp.float32).reshape(1, -1)
        return jnp.pad(b, ((0, 0), (0, out_pad - b.shape[1])))

    w0 = weights[0]
    params = [
        pad_w(w0[:n_obs], out_pads[0]),   # (n_obs,    h0_pad)
        pad_w(w0[n_obs:], out_pads[0]),   # (n_action, h0_pad)
        pad_b(biases[0], out_pads[0]),    # (1,        h0_pad)
    ]
    for l in range(1, n_layers):
        params.append(pad_w(weights[l], out_pads[l], in_pad=out_pads[l - 1]))
        params.append(pad_b(biases[l], out_pads[l]))
    return tuple(params)


def _resident_spec(shape, *, multi_step):
    """BlockSpec for grid-invariant params: constant index map keeps them
    resident in VMEM.  With >1 grid steps, request a single buffer (nothing to
    double-buffer for a block that never changes)."""
    if multi_step:
        try:
            return pl.BlockSpec(shape, lambda i: (0, 0), pipeline_mode=pl.Buffered(1))
        except TypeError:  # JAX version without pipeline_mode on BlockSpec
            pass
    return pl.BlockSpec(shape, lambda i: (0, 0))


# --------------------------------------------------------------------------- #
# Forward wrapper
# --------------------------------------------------------------------------- #
def qnet_forward(obs, action, params, *, batch_tile=None):
    """Fused Pallas forward pass of QNet.

    obs:    (B, n_obs)    float32
    action: (B, n_action) float32
    params: tuple from prepare_qnet_params()
    returns (B, 1)        float32
    """
    B, n_obs = obs.shape
    _, n_action = action.shape
    assert params[0].shape[0] == n_obs and params[1].shape[0] == n_action, (
        "prepared params do not match obs/action feature sizes"
    )
    n_layers = (len(params) - 1) // 2
    # Padded output widths per layer, recovered from the prepared arrays.
    out_pads = [params[0].shape[1]] + [
        params[3 + 2 * (l - 1)].shape[1] for l in range(1, n_layers)
    ]

    # ---- batch tiling ------------------------------------------------------
    # Single grid step whenever the batch fits (best for single-TC v5e/v6e:
    # per-step overhead dwarfs compute at these shapes).  For very large
    # batches, split into an even number of large "parallel" steps so v7x's
    # two TensorCores each get a meaningful chunk.
    if batch_tile is None:
        B_r = _round_up(B, SUBLANE)
        if B_r <= _SINGLE_STEP_MAX_ROWS:
            batch_tile = B_r
        else:
            steps = _cdiv(B_r, _SINGLE_STEP_MAX_ROWS)
            steps += steps & 1  # even step count -> clean 2-way megacore split
            batch_tile = _round_up(_cdiv(B_r, steps), SUBLANE)
    batch_tile = max(SUBLANE, _round_up(batch_tile, SUBLANE))

    B_pad = _round_up(B, batch_tile)
    if B_pad != B:  # only pads when B is not already a tile multiple
        obs = jnp.pad(obs, ((0, B_pad - B), (0, 0)))
        action = jnp.pad(action, ((0, B_pad - B), (0, 0)))
    num_steps = B_pad // batch_tile
    grid = (num_steps,)

    # ---- specs -------------------------------------------------------------
    in_specs = [
        pl.BlockSpec((batch_tile, n_obs), lambda i: (i, 0)),
        pl.BlockSpec((batch_tile, n_action), lambda i: (i, 0)),
    ]
    for p in params:
        in_specs.append(_resident_spec(p.shape, multi_step=num_steps > 1))

    # Narrow output: last dim 1 == full array dim (legal), 128x less writeback.
    out_spec = pl.BlockSpec((batch_tile, 1), lambda i: (i, 0))

    # ---- VMEM budget (per-generation safe: capped at 40 MiB for v7x) --------
    param_bytes = sum(int(p.size) * 4 for p in params)
    io_tile_bytes = 4 * batch_tile * (n_obs + n_action + 1)
    act_bytes = 4 * batch_tile * max(out_pads)
    vmem_needed = param_bytes * 2 + io_tile_bytes * 2 + act_bytes * 4
    vmem_limit = int(min(max(vmem_needed, 16 << 20), 40 << 20))

    # ---- advisory cost estimate ---------------------------------------------
    flops = 2 * B_pad * (n_obs + n_action) * out_pads[0]
    for l in range(1, n_layers):
        flops += 2 * B_pad * out_pads[l - 1] * out_pads[l]
    bytes_accessed = 4 * (B_pad * (n_obs + n_action) + B_pad) + param_bytes
    cost = pl.CostEstimate(
        flops=int(flops), transcendentals=0, bytes_accessed=int(bytes_accessed)
    )

    out = pl.pallas_call(
        functools.partial(_qnet_kernel, n_layers),
        out_shape=jax.ShapeDtypeStruct((B_pad, 1), jnp.float32),
        grid_spec=pltpu.PrefetchScalarGridSpec(
            num_scalar_prefetch=0,
            grid=grid,
            in_specs=in_specs,
            out_specs=out_spec,
        ),
        compiler_params=pltpu.CompilerParams(
            dimension_semantics=("parallel",),
            vmem_limit_bytes=vmem_limit,
        ),
        cost_estimate=cost,
    )(obs, action, *params)

    return out if B_pad == B else out[:B]


# --------------------------------------------------------------------------- #
# Init + reference (PyTorch-equivalent)
# --------------------------------------------------------------------------- #
def init_qnet_params(key, n_obs, n_action, n_hiddens):
    """Matches QNet.__init__ shapes (nn.Linear default U(-1/sqrt(fan_in), ...)).
    Weights stored as (in, out) so the kernel does x @ W (== torch x @ W.T)."""
    n_feature = n_obs + n_action
    dims = [n_feature] + list(n_hiddens) + [1]
    weights, biases = [], []
    for i in range(len(dims) - 1):
        fan_in, fan_out = dims[i], dims[i + 1]
        key, kw, kb = jax.random.split(key, 3)
        bound = 1.0 / math.sqrt(fan_in)
        w = jax.random.uniform(kw, (fan_in, fan_out), jnp.float32, -bound, bound)
        b = jax.random.uniform(kb, (1, fan_out), jnp.float32, -bound, bound)
        weights.append(w)
        biases.append(b)
    return weights, biases


def qnet_reference(obs, action, weights, biases):
    """Pure-JAX reference matching QNet.forward (concat -> Linear/ReLU stack)."""
    h = jnp.concatenate([obs, action], axis=-1)
    for i, (w, b) in enumerate(zip(weights, biases)):
        h = h @ w + b
        if i < len(weights) - 1:
            h = jnp.maximum(h, 0.0)
    return h


if __name__ == "__main__":
    # Small shapes consistent with QNet(n_obs, n_action, n_hiddens)
    n_obs, n_action = 12, 4
    n_hiddens = [32, 32]
    batch = 16

    key = jax.random.PRNGKey(0)
    key, k_obs, k_act, k_params = jax.random.split(key, 4)

    obs = jax.random.normal(k_obs, (batch, n_obs), jnp.float32)
    action = jax.random.normal(k_act, (batch, n_action), jnp.float32)
    weights, biases = init_qnet_params(k_params, n_obs, n_action, n_hiddens)

    # One-time parameter prep (hoisted out of the per-call path).
    prepared = prepare_qnet_params(weights, biases, n_obs)

    fwd = jax.jit(qnet_forward)
    q = jax.block_until_ready(fwd(obs, action, prepared))

    q_ref = qnet_reference(obs, action, weights, biases)
    assert q.shape == (batch, 1), q.shape
    assert jnp.allclose(q, q_ref, atol=1e-4, rtol=1e-4), "Pallas result mismatch"

    print("KERNEL_OK")
</pallas_src>

<mosaic_0001>
module attributes {stable_mosaic.version = 11 : i64} {
  func.func @_qnet_kernel(%arg0: i32, %arg1: memref<16x12xf32, #tpu.memory_space<vmem>>, %arg2: memref<16x4xf32, #tpu.memory_space<vmem>>, %arg3: memref<12x128xf32, #tpu.memory_space<vmem>>, %arg4: memref<4x128xf32, #tpu.memory_space<vmem>>, %arg5: memref<1x128xf32, #tpu.memory_space<vmem>>, %arg6: memref<128x128xf32, #tpu.memory_space<vmem>>, %arg7: memref<1x128xf32, #tpu.memory_space<vmem>>, %arg8: memref<128x128xf32, #tpu.memory_space<vmem>>, %arg9: memref<1x128xf32, #tpu.memory_space<vmem>>, %arg10: memref<16x1xf32, #tpu.memory_space<vmem>>) attributes {dimension_semantics = [#tpu.dimension_semantics<parallel>], iteration_bounds = array<i64: 1>, scalar_prefetch = 0 : i64, scratch_operands = 0 : i64, tpu.core_type = #tpu.core_type<tc>, window_params = [{transform_indices = @transform_0, window_bounds = array<i64: 16, 12>}, {transform_indices = @transform_1, window_bounds = array<i64: 16, 4>}, {pipeline_mode = #tpu.pipeline_mode<synchronous>, transform_indices = @transform_2, window_bounds = array<i64: 12, 128>}, {pipeline_mode = #tpu.pipeline_mode<synchronous>, transform_indices = @transform_3, window_bounds = array<i64: 4, 128>}, {pipeline_mode = #tpu.pipeline_mode<synchronous>, transform_indices = @transform_4, window_bounds = array<i64: 1, 128>}, {pipeline_mode = #tpu.pipeline_mode<synchronous>, transform_indices = @transform_5, window_bounds = array<i64: 128, 128>}, {pipeline_mode = #tpu.pipeline_mode<synchronous>, transform_indices = @transform_6, window_bounds = array<i64: 1, 128>}, {pipeline_mode = #tpu.pipeline_mode<synchronous>, transform_indices = @transform_7, window_bounds = array<i64: 128, 128>}, {pipeline_mode = #tpu.pipeline_mode<synchronous>, transform_indices = @transform_8, window_bounds = array<i64: 1, 128>}, {transform_indices = @transform_9, window_bounds = array<i64: 16, 1>}]} {
    %c0 = arith.constant 0 : index
    %c0_0 = arith.constant 0 : index
    %0 = vector.load %arg1[%c0, %c0_0] : memref<16x12xf32, #tpu.memory_space<vmem>>, vector<16x12xf32>
    %c0_1 = arith.constant 0 : index
    %c0_2 = arith.constant 0 : index
    %1 = vector.load %arg3[%c0_1, %c0_2] : memref<12x128xf32, #tpu.memory_space<vmem>>, vector<12x128xf32>
    %cst = arith.constant dense<0.000000e+00> : vector<16x128xf32>
    %2 = tpu.matmul %0, %1, %cst {dimension_numbers = #tpu.dot_dimension_numbers<[1], [0], [0], [1], [0, 0, 1, 1], [], []>} : vector<16x12xf32>, vector<12x128xf32>, vector<16x128xf32> -> vector<16x128xf32>
    %c0_3 = arith.constant 0 : index
    %c0_4 = arith.constant 0 : index
    %3 = vector.load %arg2[%c0_3, %c0_4] : memref<16x4xf32, #tpu.memory_space<vmem>>, vector<16x4xf32>
    %c0_5 = arith.constant 0 : index
    %c0_6 = arith.constant 0 : index
    %4 = vector.load %arg4[%c0_5, %c0_6] : memref<4x128xf32, #tpu.memory_space<vmem>>, vector<4x128xf32>
    %cst_7 = arith.constant dense<0.000000e+00> : vector<16x128xf32>
    %5 = tpu.matmul %3, %4, %cst_7 {dimension_numbers = #tpu.dot_dimension_numbers<[1], [0], [0], [1], [0, 0, 1, 1], [], []>} : vector<16x4xf32>, vector<4x128xf32>, vector<16x128xf32> -> vector<16x128xf32>
    %6 = arith.addf %2, %5 : vector<16x128xf32>
    %c0_8 = arith.constant 0 : index
    %c0_9 = arith.constant 0 : index
    %7 = vector.load %arg5[%c0_8, %c0_9] : memref<1x128xf32, #tpu.memory_space<vmem>>, vector<1x128xf32>
    %8 = vector.broadcast %7 : vector<1x128xf32> to vector<16x128xf32>
    %9 = arith.addf %6, %8 : vector<16x128xf32>
    %cst_10 = arith.constant 0.000000e+00 : f32
    %10 = vector.broadcast %cst_10 : f32 to vector<16x128xf32>
    %11 = arith.maximumf %9, %10 : vector<16x128xf32>
    %c0_11 = arith.constant 0 : index
    %c0_12 = arith.constant 0 : index
    %12 = vector.load %arg6[%c0_11, %c0_12] : memref<128x128xf32, #tpu.memory_space<vmem>>, vector<128x128xf32>
    %c0_13 = arith.constant 0 : index
    %c0_14 = arith.constant 0 : index
    %13 = vector.load %arg7[%c0_13, %c0_14] : memref<1x128xf32, #tpu.memory_space<vmem>>, vector<1x128xf32>
    %cst_15 = arith.constant dense<0.000000e+00> : vector<16x128xf32>
    %14 = tpu.matmul %11, %12, %cst_15 {dimension_numbers = #tpu.dot_dimension_numbers<[1], [0], [0], [1], [0, 0, 1, 1], [], []>} : vector<16x128xf32>, vector<128x128xf32>, vector<16x128xf32> -> vector<16x128xf32>
    %15 = vector.broadcast %13 : vector<1x128xf32> to vector<16x128xf32>
    %16 = arith.addf %14, %15 : vector<16x128xf32>
    %cst_16 = arith.constant 0.000000e+00 : f32
    %17 = vector.broadcast %cst_16 : f32 to vector<16x128xf32>
    %18 = arith.maximumf %16, %17 : vector<16x128xf32>
    %c0_17 = arith.constant 0 : index
    %c0_18 = arith.constant 0 : index
    %19 = vector.load %arg8[%c0_17, %c0_18] : memref<128x128xf32, #tpu.memory_space<vmem>>, vector<128x128xf32>
    %c0_19 = arith.constant 0 : index
    %c0_20 = arith.constant 0 : index
    %20 = vector.load %arg9[%c0_19, %c0_20] : memref<1x128xf32, #tpu.memory_space<vmem>>, vector<1x128xf32>
    %cst_21 = arith.constant dense<0.000000e+00> : vector<16x128xf32>
    %21 = tpu.matmul %18, %19, %cst_21 {dimension_numbers = #tpu.dot_dimension_numbers<[1], [0], [0], [1], [0, 0, 1, 1], [], []>} : vector<16x128xf32>, vector<128x128xf32>, vector<16x128xf32> -> vector<16x128xf32>
    %22 = vector.broadcast %20 : vector<1x128xf32> to vector<16x128xf32>
    %23 = arith.addf %21, %22 : vector<16x128xf32>
    %24 = vector.extract_strided_slice %23 {offsets = [0, 0], sizes = [16, 1], strides = [1, 1]} : vector<16x128xf32> to vector<16x1xf32>
    %c0_22 = arith.constant 0 : index
    %c0_23 = arith.constant 0 : index
    %25 = vector.load %arg10[%c0_22, %c0_23] : memref<16x1xf32, #tpu.memory_space<vmem>>, vector<16x1xf32>
    tpu.vector_store %arg10[%c0_22, %c0_23], %24 {strides = array<i32>} : memref<16x1xf32, #tpu.memory_space<vmem>>, vector<16x1xf32>,
    return
  }
  func.func @transform_0(%arg0: i32) -> (i32, i32) {
    %c0_i32 = arith.constant 0 : i32
    %c0_i32_0 = arith.constant 0 : i32
    return %arg0, %c0_i32 : i32, i32
  }
  func.func @transform_1(%arg0: i32) -> (i32, i32) {
    %c0_i32 = arith.constant 0 : i32
    %c0_i32_0 = arith.constant 0 : i32
    return %arg0, %c0_i32 : i32, i32
  }
  func.func @transform_2(%arg0: i32) -> (i32, i32) {
    %c0_i32 = arith.constant 0 : i32
    %c0_i32_0 = arith.constant 0 : i32
    %c0_i32_1 = arith.constant 0 : i32
    return %c0_i32, %c0_i32_0 : i32, i32
  }
  func.func @transform_3(%arg0: i32) -> (i32, i32) {
    %c0_i32 = arith.constant 0 : i32
    %c0_i32_0 = arith.constant 0 : i32
    %c0_i32_1 = arith.constant 0 : i32
    return %c0_i32, %c0_i32_0 : i32, i32
  }
  func.func @transform_4(%arg0: i32) -> (i32, i32) {
    %c0_i32 = arith.constant 0 : i32
    %c0_i32_0 = arith.constant 0 : i32
    %c0_i32_1 = arith.constant 0 : i32
    return %c0_i32, %c0_i32_0 : i32, i32
  }
  func.func @transform_5(%arg0: i32) -> (i32, i32) {
    %c0_i32 = arith.constant 0 : i32
    %c0_i32_0 = arith.constant 0 : i32
    %c0_i32_1 = arith.constant 0 : i32
    return %c0_i32, %c0_i32_0 : i32, i32
  }
  func.func @transform_6(%arg0: i32) -> (i32, i32) {
    %c0_i32 = arith.constant 0 : i32
    %c0_i32_0 = arith.constant 0 : i32
    %c0_i32_1 = arith.constant 0 : i32
    return %c0_i32, %c0_i32_0 : i32, i32
  }
  func.func @transform_7(%arg0: i32) -> (i32, i32) {
    %c0_i32 = arith.constant 0 : i32
    %c0_i32_0 = arith.constant 0 : i32
    %c0_i32_1 = arith.constant 0 : i32
    return %c0_i32, %c0_i32_0 : i32, i32
  }
  func.func @transform_8(%arg0: i32) -> (i32, i32) {
    %c0_i32 = arith.constant 0 : i32
    %c0_i32_0 = arith.constant 0 : i32
    %c0_i32_1 = arith.constant 0 : i32
    return %c0_i32, %c0_i32_0 : i32, i32
  }
  func.func @transform_9(%arg0: i32) -> (i32, i32) {
    %c0_i32 = arith.constant 0 : i32
    %c0_i32_0 = arith.constant 0 : i32
    return %arg0, %c0_i32 : i32, i32
  }
}

</mosaic_0001>

<llo_original>
// kernel: qnet_forward.1
$region0: #{qnet_forward.1}
  #allocation0 [shape = 'u32[]', space=smem, size = 0x4, offset = 0x4, fixed_abs, tag = 'smem constant byte address 0x4 - core index']
  #allocation1 [shape = 'u32[144,128]{1,0:T(1,128)}', space=vmem, size = 0x12000, scoped, tag = 'internal scratch']
  %s0 = inlined_call_operand.vmem [shape: f32[16,12], index: 0, kind: input, shape index: {}]
  %s1 = inlined_call_operand.vmem [shape: f32[16,4], index: 1, kind: input, shape index: {}]
  %s2 = inlined_call_operand.hbm [shape: f32[12,128], index: 2, kind: input, shape index: {}]
  %s3 = inlined_call_operand.vmem [shape: f32[4,128], index: 3, kind: input, shape index: {}]
  %s4 = inlined_call_operand.vmem [shape: f32[1,128], index: 4, kind: input, shape index: {}]
  %s5 = inlined_call_operand.hbm [shape: f32[128,128], index: 5, kind: input, shape index: {}]
  %s6 = inlined_call_operand.vmem [shape: f32[1,128], index: 6, kind: input, shape index: {}]
  %s7 = inlined_call_operand.hbm [shape: f32[128,128], index: 7, kind: input, shape index: {}]
  %s8 = inlined_call_operand.vmem [shape: f32[1,128], index: 8, kind: input, shape index: {}]
  %s9 = inlined_call_operand.vmem [shape: f32[16,1], index: 9, kind: output, shape index: {}]
  %s10 = sld [smem:[#allocation0]]
  $region58: #{qnet_forward.1} parent=0
    _
  %s12 = ssub.s32 1, %s10
  %s13 = scalar_select 0, %s12, %s10
  $region1: #{qnet_forward.1} parent=0
    #allocation2 [shape = 'u8[8192]{0}', space=vmem, size = 0x2000, scoped, tag = 'input window, operand 2, single buffered']
    #allocation3 [shape = 's32[1]{0}', space=sflag, size = 0x4, scoped, tag = 'scoped memory for qnet_forward.1']
    #allocation4 [shape = 'u8[65536]{0}', space=vmem, size = 0x10000, scoped, tag = 'input window, operand 5, single buffered']
    #allocation5 [shape = 's32[1]{0}', space=sflag, size = 0x4, scoped, tag = 'scoped memory for qnet_forward.1']
    #allocation6 [shape = 'u8[65536]{0}', space=vmem, size = 0x10000, scoped, tag = 'input window, operand 7, single buffered']
    %14 = vsyncpa [#allocation3], 0
    %15 = vsyncpa [#allocation5], 0
    // Predicated region
    $region2: #{qnet_forward.1} parent=1 // pred_check
      _
    $region3: #{qnet_forward.1} parent=1 // pred_check_branch
      %17 = sbr.rel (0) target = $region5
    $region4: #{qnet_forward.1} parent=1 // pred_region
      _
    $region5: #{qnet_forward.1} parent=1 // pred_fallthru
      _
    // Predicated region
    $region6: #{qnet_forward.1} parent=1 // pred_check
      _
    $region7: #{qnet_forward.1} parent=1 // pred_check_branch
      %19 = sbr.rel (0) target = $region9
    $region8: #{qnet_forward.1} parent=1 // pred_region
      _
    $region9: #{qnet_forward.1} parent=1 // pred_fallthru
      _
    // Predicated region
    $region10: #{qnet_forward.1} parent=1 // pred_check
      _
    $region11: #{qnet_forward.1} parent=1 // pred_check_branch
      %21 = sbr.rel (0) target = $region13
    $region12: #{qnet_forward.1} parent=1 // pred_region
      %s23 = ssub.s32 256, 256
      %24 = vsyncadd [#allocation3], %s23
      %s25 = sshll.u32 [#allocation2], 4
      %s26 = int_to_ptr.vmem [resolvable:$true] %s25
      %31 = dma.hbm_to_vmem [thread:$0]  %s2, 256, %s26, [#allocation3], 128, 128, 8
    $region13: #{qnet_forward.1} parent=1 // pred_fallthru
      _
    // Predicated region
    $region14: #{qnet_forward.1} parent=1 // pred_check
      _
    $region15: #{qnet_forward.1} parent=1 // pred_check_branch
      %33 = sbr.rel (0) target = $region17
    $region16: #{qnet_forward.1} parent=1 // pred_region
      _
    $region17: #{qnet_forward.1} parent=1 // pred_fallthru
      _
    // Predicated region
    $region18: #{qnet_forward.1} parent=1 // pred_check
      _
    $region19: #{qnet_forward.1} parent=1 // pred_check_branch
      %35 = sbr.rel (0) target = $region21
    $region20: #{qnet_forward.1} parent=1 // pred_region
      _
    $region21: #{qnet_forward.1} parent=1 // pred_fallthru
      _
    // Predicated region
    $region22: #{qnet_forward.1} parent=1 // pred_check
      _
    $region23: #{qnet_forward.1} parent=1 // pred_check_branch
      %37 = sbr.rel (0) target = $region25
    $region24: #{qnet_forward.1} parent=1 // pred_region
      %s39 = ssub.s32 2048, 2048
      %40 = vsyncadd [#allocation5], %s39
      %s41 = sshll.u32 [#allocation4], 4
      %s42 = int_to_ptr.vmem [resolvable:$true] %s41
      %47 = dma.hbm_to_vmem [thread:$0]  %s5, 2048, %s42, [#allocation5], 128, 128, 8
    $region25: #{qnet_forward.1} parent=1 // pred_fallthru
      _
    // Predicated region
    $region26: #{qnet_forward.1} parent=1 // pred_check
      _
    $region27: #{qnet_forward.1} parent=1 // pred_check_branch
      %49 = sbr.rel (0) target = $region29
    $region28: #{qnet_forward.1} parent=1 // pred_region
      _
    $region29: #{qnet_forward.1} parent=1 // pred_fallthru
      _
    // Predicated region
    $region30: #{qnet_forward.1} parent=1 // pred_check
      _
    $region31: #{qnet_forward.1} parent=1 // pred_check_branch
      %51 = sbr.rel (0) target = $region33
    $region32: #{qnet_forward.1} parent=1 // pred_region
      %s53 = ssub.s32 2048, 2048
      %54 = vsyncadd [#allocation5], %s53
      %s55 = sshll.u32 [#allocation6], 4
      %s56 = int_to_ptr.vmem [resolvable:$true] %s55
      %61 = dma.hbm_to_vmem [thread:$0]  %s7, 2048, %s56, [#allocation5], 128, 128, 8
    $region33: #{qnet_forward.1} parent=1 // pred_fallthru
      _
    // Predicated region
    $region34: #{qnet_forward.1} parent=1 // pred_check
      _
    $region35: #{qnet_forward.1} parent=1 // pred_check_branch
      %63 = sbr.rel (0) target = $region37
    $region36: #{qnet_forward.1} parent=1 // pred_region
      _
    $region37: #{qnet_forward.1} parent=1 // pred_fallthru
      _
    // Predicated region
    $region38: #{qnet_forward.1} parent=1 // pred_check
      _
    $region39: #{qnet_forward.1} parent=1 // pred_check_branch
      %65 = sbr.rel (0) target = $region41
    $region40: #{qnet_forward.1} parent=1 // pred_region
      %66 = dma.done [#allocation3], 256
    $region41: #{qnet_forward.1} parent=1 // pred_fallthru
      _
    // Predicated region
    $region42: #{qnet_forward.1} parent=1 // pred_check
      _
    $region43: #{qnet_forward.1} parent=1 // pred_check_branch
      %68 = sbr.rel (0) target = $region45
    $region44: #{qnet_forward.1} parent=1 // pred_region
      %69 = dma.done [#allocation5], 2048
    $region45: #{qnet_forward.1} parent=1 // pred_fallthru
      _
    // Predicated region
    $region46: #{qnet_forward.1} parent=1 // pred_check
      _
    $region47: #{qnet_forward.1} parent=1 // pred_check_branch
      %71 = sbr.rel (0) target = $region49
    $region48: #{qnet_forward.1} parent=1 // pred_region
      %72 = dma.done [#allocation5], 2048
    $region49: #{qnet_forward.1} parent=1 // pred_fallthru
      _
    %v73 = vld [vmem:[%s0] sm:$0xff]
    %v74 = vld [vmem:[%s0 + $0x8] sm:$0xff]
    %v75 = vld [vmem:[#allocation2] sm:$0xff]
    %v76 = vld [vmem:[#allocation2 + $0x8] sm:$0xf]
    %v77 = vld [vmem:[%s1] sm:$0xff]
    %v78 = vld [vmem:[%s1 + $0x8] sm:$0xff]
    %v79 = vld [vmem:[%s3] sm:$0xf]
    %vm80 = vcmask 31744
    %v82 = vsel %vm80, %v77, 0
    %v85 = vsel %vm80, %v78, 0
    %vm87 = vcmask 1043456
    %v89 = vsel %vm87, %v79, 0
    %91 = vmatprep.subr.mxu0 0.0
    %92 = vmatpush1.msra.mxu0 0.0
    %93 = vmatprep.subr.mxu0 0.0
    %94 = vmatpush1.msra.mxu0 0.0
    %95 = vmatprep.subr.mxu0 0.0
    %96 = vmatpush1.msra.mxu0 0.0
    %97 = vmatprep.subr.mxu0 0.0
    %98 = vmatpush1.msra.mxu0 0.0
    %99 = vmatprep.subr.mxu0 0.0
    %100 = vmatpush1.msra.mxu0 0.0
    %101 = vmatprep.subr.mxu0 0.0
    %102 = vmatpush1.msra.mxu0 0.0
    %103 = vmatprep.subr.mxu0 0.0
    %104 = vmatpush1.msra.mxu0 0.0
    %105 = vmatprep.subr.mxu0 0.0
    %106 = vmatpush1.msra.mxu0 0.0
    %107 = vmatprep.subr.mxu0 0.0
    %108 = vmatpush1.msra.mxu0 0.0
    %109 = vmatprep.subr.mxu0 0.0
    %110 = vmatpush1.msra.mxu0 0.0
    %111 = vmatprep.subr.mxu0 0.0
    %112 = vmatpush1.msra.mxu0 0.0
    %113 = vmatprep.subr.mxu0 0.0
    %114 = vmatpush1.msra.mxu0 0.0
    %115 = vmatprep.subr.mxu0 0.0
    %116 = vmatpush1.msra.mxu0 0.0
    %117 = vmatprep.subr.mxu0 0.0
    %118 = vmatpush1.msra.mxu0 0.0
    %119 = vmatprep.subr.mxu0 0.0
    %120 = vmatpush1.msra.mxu0 0.0
    %121 = vmatprep.subr.mxu0 0.0
    %122 = vmatpush1.msra.mxu0 %v89
    %123 = vmatprep.subr.mxu0 0.0
    %124 = vmatpush2.msra.mxu0 0.0
    %125 = vmatprep.subr.mxu0 0.0
    %126 = vmatpush2.msra.mxu0 0.0
    %127 = vmatprep.subr.mxu0 0.0
    %128 = vmatpush2.msra.mxu0 0.0
    %129 = vmatprep.subr.mxu0 0.0
    %130 = vmatpush2.msra.mxu0 0.0
    %131 = vmatprep.subr.mxu0 0.0
    %132 = vmatpush2.msra.mxu0 0.0
    %133 = vmatprep.subr.mxu0 0.0
    %134 = vmatpush2.msra.mxu0 0.0
    %135 = vmatprep.subr.mxu0 0.0
    %136 = vmatpush2.msra.mxu0 0.0
    %137 = vmatprep.subr.mxu0 0.0
    %138 = vmatpush2.msra.mxu0 0.0
    %139 = vmatprep.subr.mxu0 0.0
    %140 = vmatpush2.msra.mxu0 0.0
    %141 = vmatprep.subr.mxu0 0.0
    %142 = vmatpush2.msra.mxu0 0.0
    %143 = vmatprep.subr.mxu0 0.0
    %144 = vmatpush2.msra.mxu0 0.0
    %145 = vmatprep.subr.mxu0 0.0
    %146 = vmatpush2.msra.mxu0 0.0
    %147 = vmatprep.subr.mxu0 0.0
    %148 = vmatpush2.msra.mxu0 0.0
    %149 = vmatprep.subr.mxu0 0.0
    %150 = vmatpush2.msra.mxu0 0.0
    %151 = vmatprep.subr.mxu0 0.0
    %152 = vmatpush2.msra.mxu0 0.0
    %153 = vmatprep.subr.mxu0 0.0
    %154 = vmatpush2.msra.mxu0 0.0
    %155 = vmatprep.mubr.f32.mxu0 0.0
    %156 = vmatmul.mubr.f32.gmra.mxu0 %v82
    %v157 = vpop.f32.mrf.mxu0
    %v158 = vadd.f32 0.0, %v157
    %v159 = vpop.f32.mrf.mxu0
    %160 = vmatprep.mubr.f32.mxu0 0.0
    %161 = vmatmul.mubr.f32.gmra.mxu0 %v85
    %v162 = vpop.f32.mrf.mxu0
    %v163 = vadd.f32 0.0, %v162
    %v164 = vpop.f32.mrf.mxu0
    %165 = vdwg.mxu0
    %vm166 = vcmask 97280
    %v168 = vsel %vm166, %v73, 0
    %v171 = vsel %vm166, %v74, 0
    %v174 = vsel %vm87, %v76, 0
    %176 = vmatprep.subr.mxu0 0.0
    %177 = vmatpush1.msra.mxu0 0.0
    %178 = vmatprep.subr.mxu0 0.0
    %179 = vmatpush1.msra.mxu0 0.0
    %180 = vmatprep.subr.mxu0 0.0
    %181 = vmatpush1.msra.mxu0 0.0
    %182 = vmatprep.subr.mxu0 0.0
    %183 = vmatpush1.msra.mxu0 0.0
    %184 = vmatprep.subr.mxu0 0.0
    %185 = vmatpush1.msra.mxu0 0.0
    %186 = vmatprep.subr.mxu0 0.0
    %187 = vmatpush1.msra.mxu0 0.0
    %188 = vmatprep.subr.mxu0 0.0
    %189 = vmatpush1.msra.mxu0 0.0
    %190 = vmatprep.subr.mxu0 0.0
    %191 = vmatpush1.msra.mxu0 0.0
    %192 = vmatprep.subr.mxu0 0.0
    %193 = vmatpush1.msra.mxu0 0.0
    %194 = vmatprep.subr.mxu0 0.0
    %195 = vmatpush1.msra.mxu0 0.0
    %196 = vmatprep.subr.mxu0 0.0
    %197 = vmatpush1.msra.mxu0 0.0
    %198 = vmatprep.subr.mxu0 0.0
    %199 = vmatpush1.msra.mxu0 0.0
    %200 = vmatprep.subr.mxu0 0.0
    %201 = vmatpush1.msra.mxu0 0.0
    %202 = vmatprep.subr.mxu0 0.0
    %203 = vmatpush1.msra.mxu0 0.0
    %204 = vmatprep.subr.mxu0 0.0
    %205 = vmatpush1.msra.mxu0 %v174
    %206 = vmatprep.subr.mxu0 0.0
    %207 = vmatpush1.msra.mxu0 %v75
    %208 = vmatprep.subr.mxu0 0.0
    %209 = vmatpush2.msra.mxu0 0.0
    %210 = vmatprep.subr.mxu0 0.0
    %211 = vmatpush2.msra.mxu0 0.0
    %212 = vmatprep.subr.mxu0 0.0
    %213 = vmatpush2.msra.mxu0 0.0
    %214 = vmatprep.subr.mxu0 0.0
    %215 = vmatpush2.msra.mxu0 0.0
    %216 = vmatprep.subr.mxu0 0.0
    %217 = vmatpush2.msra.mxu0 0.0
    %218 = vmatprep.subr.mxu0 0.0
    %219 = vmatpush2.msra.mxu0 0.0
    %220 = vmatprep.subr.mxu0 0.0
    %221 = vmatpush2.msra.mxu0 0.0
    %222 = vmatprep.subr.mxu0 0.0
    %223 = vmatpush2.msra.mxu0 0.0
    %224 = vmatprep.subr.mxu0 0.0
    %225 = vmatpush2.msra.mxu0 0.0
    %226 = vmatprep.subr.mxu0 0.0
    %227 = vmatpush2.msra.mxu0 0.0
    %228 = vmatprep.subr.mxu0 0.0
    %229 = vmatpush2.msra.mxu0 0.0
    %230 = vmatprep.subr.mxu0 0.0
    %231 = vmatpush2.msra.mxu0 0.0
    %232 = vmatprep.subr.mxu0 0.0
    %233 = vmatpush2.msra.mxu0 0.0
    %234 = vmatprep.subr.mxu0 0.0
    %235 = vmatpush2.msra.mxu0 0.0
    %236 = vmatprep.subr.mxu0 0.0
    %237 = vmatpush2.msra.mxu0 0.0
    %238 = vmatprep.subr.mxu0 0.0
    %239 = vmatpush2.msra.mxu0 0.0
    %240 = vmatprep.mubr.f32.mxu0 0.0
    %241 = vmatmul.mubr.f32.gmra.mxu0 %v168
    %v242 = vpop.f32.mrf.mxu0
    %v243 = vadd.f32 %v158, %v242
    %v244 = vpop.f32.mrf.mxu0
    %245 = vmatprep.mubr.f32.mxu0 0.0
    %246 = vmatmul.mubr.f32.gmra.mxu0 %v171
    %v247 = vpop.f32.mrf.mxu0
    %v248 = vadd.f32 %v163, %v247
    %v249 = vpop.f32.mrf.mxu0
    %250 = vdwg.mxu0
    %v251 = vld [vmem:[%s4] sm:$0x1]
    %v253 = vlaneseq
    %v254 = vshrl.u32 %v253, 7
    %v255 = vsub.s32 0, %v254
    %v256 = vrot.slane %v251, %v255
    %v258 = vadd.f32 %v243, %v256
    %v259 = vadd.f32 %v248, %v256
    %v260 = vmax.f32 %v258, 0.0
    %v261 = vmax.f32 %v259, 0.0
    %v262 = vld [vmem:[#allocation4] sm:$0xff]
    %v263 = vld [vmem:[#allocation4 + $0x8] sm:$0xff]
    %v264 = vld [vmem:[#allocation4 + $0x10] sm:$0xff]
    %v265 = vld [vmem:[#allocation4 + $0x18] sm:$0xff]
    %v266 = vld [vmem:[#allocation4 + $0x20] sm:$0xff]
    %v267 = vld [vmem:[#allocation4 + $0x28] sm:$0xff]
    %v268 = vld [vmem:[#allocation4 + $0x30] sm:$0xff]
    %v269 = vld [vmem:[#allocation4 + $0x38] sm:$0xff]
    %v270 = vld [vmem:[#allocation4 + $0x40] sm:$0xff]
    %v271 = vld [vmem:[#allocation4 + $0x48] sm:$0xff]
    %v272 = vld [vmem:[#allocation4 + $0x50] sm:$0xff]
    %v273 = vld [vmem:[#allocation4 + $0x58] sm:$0xff]
    %v274 = vld [vmem:[#allocation4 + $0x60] sm:$0xff]
    %v275 = vld [vmem:[#allocation4 + $0x68] sm:$0xff]
    %v276 = vld [vmem:[#allocation4 + $0x70] sm:$0xff]
    %v277 = vld [vmem:[#allocation4 + $0x78] sm:$0xff]
    %v278 = vld [vmem:[%s6] sm:$0x1]
    %v280 = vlaneseq
    %v281 = vshrl.u32 %v280, 7
    %v282 = vsub.s32 0, %v281
    %v283 = vrot.slane %v278, %v282
    %285 = vmatprep.subr.mxu0 0.0
    %286 = vmatpush1.msra.mxu0 %v277
    %287 = vmatprep.subr.mxu0 0.0
    %288 = vmatpush1.msra.mxu0 %v276
    %289 = vmatprep.subr.mxu0 0.0
    %290 = vmatpush1.msra.mxu0 %v275
    %291 = vmatprep.subr.mxu0 0.0
    %292 = vmatpush1.msra.mxu0 %v274
    %293 = vmatprep.subr.mxu0 0.0
    %294 = vmatpush1.msra.mxu0 %v273
    %295 = vmatprep.subr.mxu0 0.0
    %296 = vmatpush1.msra.mxu0 %v272
    %297 = vmatprep.subr.mxu0 0.0
    %298 = vmatpush1.msra.mxu0 %v271
    %299 = vmatprep.subr.mxu0 0.0
    %300 = vmatpush1.msra.mxu0 %v270
    %301 = vmatprep.subr.mxu0 0.0
    %302 = vmatpush1.msra.mxu0 %v269
    %303 = vmatprep.subr.mxu0 0.0
    %304 = vmatpush1.msra.mxu0 %v268
    %305 = vmatprep.subr.mxu0 0.0
    %306 = vmatpush1.msra.mxu0 %v267
    %307 = vmatprep.subr.mxu0 0.0
    %308 = vmatpush1.msra.mxu0 %v266
    %309 = vmatprep.subr.mxu0 0.0
    %310 = vmatpush1.msra.mxu0 %v265
    %311 = vmatprep.subr.mxu0 0.0
    %312 = vmatpush1.msra.mxu0 %v264
    %313 = vmatprep.subr.mxu0 0.0
    %314 = vmatpush1.msra.mxu0 %v263
    %315 = vmatprep.subr.mxu0 0.0
    %316 = vmatpush1.msra.mxu0 %v262
    %317 = vmatprep.subr.mxu0 0.0
    %318 = vmatpush2.msra.mxu0 0.0
    %319 = vmatprep.subr.mxu0 0.0
    %320 = vmatpush2.msra.mxu0 0.0
    %321 = vmatprep.subr.mxu0 0.0
    %322 = vmatpush2.msra.mxu0 0.0
    %323 = vmatprep.subr.mxu0 0.0
    %324 = vmatpush2.msra.mxu0 0.0
    %325 = vmatprep.subr.mxu0 0.0
    %326 = vmatpush2.msra.mxu0 0.0
    %327 = vmatprep.subr.mxu0 0.0
    %328 = vmatpush2.msra.mxu0 0.0
    %329 = vmatprep.subr.mxu0 0.0
    %330 = vmatpush2.msra.mxu0 0.0
    %331 = vmatprep.subr.mxu0 0.0
    %332 = vmatpush2.msra.mxu0 0.0
    %333 = vmatprep.subr.mxu0 0.0
    %334 = vmatpush2.msra.mxu0 0.0
    %335 = vmatprep.subr.mxu0 0.0
    %336 = vmatpush2.msra.mxu0 0.0
    %337 = vmatprep.subr.mxu0 0.0
    %338 = vmatpush2.msra.mxu0 0.0
    %339 = vmatprep.subr.mxu0 0.0
    %340 = vmatpush2.msra.mxu0 0.0
    %341 = vmatprep.subr.mxu0 0.0
    %342 = vmatpush2.msra.mxu0 0.0
    %343 = vmatprep.subr.mxu0 0.0
    %344 = vmatpush2.msra.mxu0 0.0
    %345 = vmatprep.subr.mxu0 0.0
    %346 = vmatpush2.msra.mxu0 0.0
    %347 = vmatprep.subr.mxu0 0.0
    %348 = vmatpush2.msra.mxu0 0.0
    %349 = vmatprep.mubr.f32.mxu0 0.0
    %350 = vmatmul.mubr.f32.gmra.mxu0 %v260
    %v351 = vpop.f32.mrf.mxu0
    %v352 = vadd.f32 %v283, %v351
    %v353 = vpop.f32.mrf.mxu0
    %354 = vmatprep.mubr.f32.mxu0 0.0
    %355 = vmatmul.mubr.f32.gmra.mxu0 %v261
    %v356 = vpop.f32.mrf.mxu0
    %v357 = vadd.f32 %v283, %v356
    %v358 = vpop.f32.mrf.mxu0
    %359 = vdwg.mxu0
    %v360 = vmax.f32 %v352, 0.0
    %v361 = vmax.f32 %v357, 0.0
    %v362 = vld [vmem:[#allocation6] sm:$0xff]
    %v363 = vld [vmem:[#allocation6 + $0x8] sm:$0xff]
    %v364 = vld [vmem:[#allocation6 + $0x10] sm:$0xff]
    %v365 = vld [vmem:[#allocation6 + $0x18] sm:$0xff]
    %v366 = vld [vmem:[#allocation6 + $0x20] sm:$0xff]
    %v367 = vld [vmem:[#allocation6 + $0x28] sm:$0xff]
    %v368 = vld [vmem:[#allocation6 + $0x30] sm:$0xff]
    %v369 = vld [vmem:[#allocation6 + $0x38] sm:$0xff]
    %v370 = vld [vmem:[#allocation6 + $0x40] sm:$0xff]
    %v371 = vld [vmem:[#allocation6 + $0x48] sm:$0xff]
    %v372 = vld [vmem:[#allocation6 + $0x50] sm:$0xff]
    %v373 = vld [vmem:[#allocation6 + $0x58] sm:$0xff]
    %v374 = vld [vmem:[#allocation6 + $0x60] sm:$0xff]
    %v375 = vld [vmem:[#allocation6 + $0x68] sm:$0xff]
    %v376 = vld [vmem:[#allocation6 + $0x70] sm:$0xff]
    %v377 = vld [vmem:[#allocation6 + $0x78] sm:$0xff]
    %v378 = vld [vmem:[%s8] sm:$0x1]
    %v380 = vlaneseq
    %v381 = vshrl.u32 %v380, 7
    %v382 = vsub.s32 0, %v381
    %v383 = vrot.slane %v378, %v382
    %385 = vmatprep.subr.mxu0 0.0
    %386 = vmatpush1.msra.mxu0 %v377
    %387 = vmatprep.subr.mxu0 0.0
    %388 = vmatpush1.msra.mxu0 %v376
    %389 = vmatprep.subr.mxu0 0.0
    %390 = vmatpush1.msra.mxu0 %v375
    %391 = vmatprep.subr.mxu0 0.0
    %392 = vmatpush1.msra.mxu0 %v374
    %393 = vmatprep.subr.mxu0 0.0
    %394 = vmatpush1.msra.mxu0 %v373
    %395 = vmatprep.subr.mxu0 0.0
    %396 = vmatpush1.msra.mxu0 %v372
    %397 = vmatprep.subr.mxu0 0.0
    %398 = vmatpush1.msra.mxu0 %v371
    %399 = vmatprep.subr.mxu0 0.0
    %400 = vmatpush1.msra.mxu0 %v370
    %401 = vmatprep.subr.mxu0 0.0
    %402 = vmatpush1.msra.mxu0 %v369
    %403 = vmatprep.subr.mxu0 0.0
    %404 = vmatpush1.msra.mxu0 %v368
    %405 = vmatprep.subr.mxu0 0.0
    %406 = vmatpush1.msra.mxu0 %v367
    %407 = vmatprep.subr.mxu0 0.0
    %408 = vmatpush1.msra.mxu0 %v366
    %409 = vmatprep.subr.mxu0 0.0
    %410 = vmatpush1.msra.mxu0 %v365
    %411 = vmatprep.subr.mxu0 0.0
    %412 = vmatpush1.msra.mxu0 %v364
    %413 = vmatprep.subr.mxu0 0.0
    %414 = vmatpush1.msra.mxu0 %v363
    %415 = vmatprep.subr.mxu0 0.0
    %416 = vmatpush1.msra.mxu0 %v362
    %417 = vmatprep.subr.mxu0 0.0
    %418 = vmatpush2.msra.mxu0 0.0
    %419 = vmatprep.subr.mxu0 0.0
    %420 = vmatpush2.msra.mxu0 0.0
    %421 = vmatprep.subr.mxu0 0.0
    %422 = vmatpush2.msra.mxu0 0.0
    %423 = vmatprep.subr.mxu0 0.0
    %424 = vmatpush2.msra.mxu0 0.0
    %425 = vmatprep.subr.mxu0 0.0
    %426 = vmatpush2.msra.mxu0 0.0
    %427 = vmatprep.subr.mxu0 0.0
    %428 = vmatpush2.msra.mxu0 0.0
    %429 = vmatprep.subr.mxu0 0.0
    %430 = vmatpush2.msra.mxu0 0.0
    %431 = vmatprep.subr.mxu0 0.0
    %432 = vmatpush2.msra.mxu0 0.0
    %433 = vmatprep.subr.mxu0 0.0
    %434 = vmatpush2.msra.mxu0 0.0
    %435 = vmatprep.subr.mxu0 0.0
    %436 = vmatpush2.msra.mxu0 0.0
    %437 = vmatprep.subr.mxu0 0.0
    %438 = vmatpush2.msra.mxu0 0.0
    %439 = vmatprep.subr.mxu0 0.0
    %440 = vmatpush2.msra.mxu0 0.0
    %441 = vmatprep.subr.mxu0 0.0
    %442 = vmatpush2.msra.mxu0 0.0
    %443 = vmatprep.subr.mxu0 0.0
    %444 = vmatpush2.msra.mxu0 0.0
    %445 = vmatprep.subr.mxu0 0.0
    %446 = vmatpush2.msra.mxu0 0.0
    %447 = vmatprep.subr.mxu0 0.0
    %448 = vmatpush2.msra.mxu0 0.0
    %449 = vmatprep.mubr.f32.mxu0 0.0
    %450 = vmatmul.mubr.f32.gmra.mxu0 %v360
    %v451 = vpop.f32.mrf.mxu0
    %v452 = vadd.f32 %v383, %v451
    %v453 = vpop.f32.mrf.mxu0
    %454 = vmatprep.mubr.f32.mxu0 0.0
    %455 = vmatmul.mubr.f32.gmra.mxu0 %v361
    %v456 = vpop.f32.mrf.mxu0
    %v457 = vadd.f32 %v383, %v456
    %v458 = vpop.f32.mrf.mxu0
    %459 = vdwg.mxu0
    %vm460 = vcmask 7168
    %461 = vst.msk [vmem:[%s9] sm:$0xff] %vm460, %v452
    %462 = vst.msk [vmem:[%s9 + $0x8] sm:$0xff] %vm460, %v457
    // Predicated region
    $region50: #{qnet_forward.1} parent=1 // pred_check
      _
    $region51: #{qnet_forward.1} parent=1 // pred_check_branch
      %464 = sbr.rel (0) target = $region53
    $region52: #{qnet_forward.1} parent=1 // pred_region
      _
    $region53: #{qnet_forward.1} parent=1 // pred_fallthru
      _
    // Predicated region
    $region54: #{qnet_forward.1} parent=1 // pred_check
      _
    $region55: #{qnet_forward.1} parent=1 // pred_check_branch
      %466 = sbr.rel (0) target = $region57
    $region56: #{qnet_forward.1} parent=1 // pred_region
      _
    $region57: #{qnet_forward.1} parent=1 // pred_fallthru
      _
    %467 = vsyncpa [#allocation3], 1
    %468 = vsyncpa [#allocation5], 1

</llo_original>
